<compile_context>
chip_gen: v5e
topology: v5e:2x2
jax: 0.10.0
libtpu: 0.0.40
codegen_flags: <defaults>
</compile_context>

<pallas_src>
import jax
import jax.numpy as jnp
from jax.experimental import pallas as pl
from jax.experimental.pallas import tpu as pltpu


# ----------------------------------------------------------------------------
# Faithful module port.
# ----------------------------------------------------------------------------
class OnlyLinear:
    """Faithful port of the PyTorch `OnlyLinear` baseline module."""

    def __init__(self):
        # Reference __init__ defines no parameters.
        pass

    def forward(self):
        # Reference forward() is `pass` -> returns None, no computation.
        # TODO(synk): no compute to port; any Pallas work here would be
        # slower than the reference (which does nothing).
        return None

    __call__ = forward


# ----------------------------------------------------------------------------
# Placeholder Pallas identity copy (smoke test only; pure HBM->HBM DMA).
# ----------------------------------------------------------------------------
def _make_hbm_copy_kernel(row_chunks):
    """Build a kernel that DMA-copies `x_hbm` to `o_hbm` chunk-by-chunk.

    `row_chunks` is a static tuple of (row_start, row_size).  A single chunk
    becomes one whole-array HBM->HBM DMA descriptor; multiple chunks are
    issued round-robin over two DMA semaphores so two descriptors are always
    in flight (hides per-descriptor issue latency, stays at HBM roofline).
    """
    n = len(row_chunks)

    def kernel(x_hbm, o_hbm, sem):
        if n == 1:
            cp = pltpu.make_async_copy(x_hbm, o_hbm, sem.at[0])
            cp.start()
            cp.wait()
            return

        descs = []
        for i, (start, size) in enumerate(row_chunks):
            slot = i % 2
            if i >= 2:
                # Free this semaphore slot before reusing it (keeps exactly
                # two DMAs outstanding at any time).
                descs[i - 2].wait()
            d = pltpu.make_async_copy(
                x_hbm.at[pl.ds(start, size), :],
                o_hbm.at[pl.ds(start, size), :],
                sem.at[slot],
            )
            d.start()
            descs.append(d)

        # Drain the (at most two) still-in-flight descriptors.
        for d in descs[-min(2, n):]:
            d.wait()

    return kernel


def pallas_identity(x: jax.Array, *, chunk_bytes: int | None = None) -> jax.Array:
    """Identity copy as pure HBM->HBM DMA (no VMEM bounce, no grid).

    - `chunk_bytes is None` (or array fits in one chunk): single whole-array
      DMA descriptor — zero grid steps, zero VMEM traffic, zero tiling math.
    - Otherwise: rows are split into ~chunk_bytes pieces (sublane-aligned),
      issued as DMA descriptors double-buffered over two semaphores.  A ragged
      last chunk is allowed (DMA has no (8,128) block constraint), so awkward
      row counts never degrade the whole copy.
    VMEM budget is irrelevant on all generations (v5e 16 MiB scoped default,
    v6e 32 MiB, v7x 64 MiB physical) because nothing is staged in VMEM.
    """
    R, C = x.shape
    itemsize = jnp.dtype(x.dtype).itemsize
    total_bytes = R * C * itemsize

    if chunk_bytes is None or total_bytes <= chunk_bytes or R <= 8:
        row_chunks = ((0, R),)
    else:
        rows_per = max(1, chunk_bytes // (C * itemsize))
        # Keep chunk starts sublane-aligned (multiples of 8 rows) for friendly
        # DMA strides; the last chunk may be ragged — that is fine for DMA.
        rows_per = max(8, (rows_per // 8) * 8)
        row_chunks = tuple(
            (s, min(rows_per, R - s)) for s in range(0, R, rows_per)
        )

    kernel = _make_hbm_copy_kernel(row_chunks)
    return pl.pallas_call(
        kernel,
        out_shape=jax.ShapeDtypeStruct((R, C), x.dtype),
        in_specs=[pl.BlockSpec(memory_space=pl.ANY)],
        out_specs=pl.BlockSpec(memory_space=pl.ANY),
        scratch_shapes=[pltpu.SemaphoreType.DMA((2,))],
        cost_estimate=pl.CostEstimate(
            flops=0, transcendentals=0, bytes_accessed=2 * total_bytes
        ),
    )(x)


if __name__ == "__main__":
    # Faithful module: forward() takes no inputs and returns None.
    model = OnlyLinear()
    out = model()
    assert out is None, "OnlyLinear.forward() must return None (matches `pass`)"

    key = jax.random.PRNGKey(0)
    k1, k2 = jax.random.split(key)

    # Small demo: single whole-array HBM->HBM DMA descriptor.
    x = jax.random.normal(k1, (16, 256), dtype=jnp.float32)
    y = pallas_identity(x)
    jax.block_until_ready(y)
    assert jnp.array_equal(x, y)

    # Larger demo with a small chunk budget to exercise the chunked,
    # double-buffered-semaphore DMA path (256 KiB array, 64 KiB chunks -> 4
    # descriptors, 2 in flight at a time).
    x2 = jax.random.normal(k2, (256, 256), dtype=jnp.float32)
    y2 = pallas_identity(x2, chunk_bytes=64 * 1024)
    jax.block_until_ready(y2)
    assert jnp.array_equal(x2, y2)

    print("KERNEL_OK")
</pallas_src>

<mosaic_0001>
module attributes {stable_mosaic.version = 11 : i64} {
  func.func @kernel(%arg0: memref<16x256xf32, #tpu.memory_space<any>>, %arg1: memref<16x256xf32, #tpu.memory_space<any>>, %arg2: memref<2x!tpu.dma_semaphore, #tpu.memory_space<semaphore_mem>>) attributes {dimension_semantics = [], scalar_prefetch = 0 : i64, scratch_operands = 1 : i64, tpu.core_type = #tpu.core_type<tc>} {
    %c0_i32 = arith.constant 0 : i32
    %0 = tpu.memref_slice %arg2[%c0_i32] : memref<2x!tpu.dma_semaphore, #tpu.memory_space<semaphore_mem>> -> memref<1x!tpu.dma_semaphore, #tpu.memory_space<semaphore_mem>>
    %1 = tpu.memref_squeeze %0 : memref<1x!tpu.dma_semaphore, #tpu.memory_space<semaphore_mem>> -> memref<!tpu.dma_semaphore, #tpu.memory_space<semaphore_mem>>
    tpu.enqueue_dma source(%arg0 : memref<16x256xf32, #tpu.memory_space<any>>) target(%arg1 : memref<16x256xf32, #tpu.memory_space<any>>) target_semaphore(%1 : memref<!tpu.dma_semaphore, #tpu.memory_space<semaphore_mem>>)
    %c0_i32_0 = arith.constant 0 : i32
    %2 = tpu.memref_slice %arg2[%c0_i32_0] : memref<2x!tpu.dma_semaphore, #tpu.memory_space<semaphore_mem>> -> memref<1x!tpu.dma_semaphore, #tpu.memory_space<semaphore_mem>>
    %3 = tpu.memref_squeeze %2 : memref<1x!tpu.dma_semaphore, #tpu.memory_space<semaphore_mem>> -> memref<!tpu.dma_semaphore, #tpu.memory_space<semaphore_mem>>
    tpu.wait_dma2 semaphore(%3 : memref<!tpu.dma_semaphore, #tpu.memory_space<semaphore_mem>>) src(%arg0 : memref<16x256xf32, #tpu.memory_space<any>>) dst(%arg1 : memref<16x256xf32, #tpu.memory_space<any>>)
    return
  }
}

</mosaic_0001>

<llo_original>
// kernel: tpu_custom_call.1
$region0: #{tpu_custom_call.1}
  #allocation0 [shape = 'u32[]', space=smem, size = 0x4, offset = 0x4, fixed_abs, tag = 'smem constant byte address 0x4 - core index']
  #allocation1 [shape = 'u32[72,128]{1,0:T(1,128)}', space=vmem, size = 0x9000, scoped, tag = 'internal scratch']
  #allocation2 [shape = 's32[2]{0}', space=sflag, size = 0x8, scoped, tag = 'scratch operand']
  #allocation3 [shape = 's32[]', space=sflag, size = 0x4, offset = 0, fixed_abs, tag = 'sflag constant byte address 0x0 - dummy sync flag']
  #allocation4 [shape = 'u32[0]{0}', space=smem, size = 0, offset = 0, fixed_abs, tag = 'smem constant byte address 0x0 - null']
  %s0 = inlined_call_operand.hbm [shape: f32[16,256], index: 0, kind: input, shape index: {}]
  %s1 = inlined_call_operand.hbm [shape: f32[16,256], index: 1, kind: output, shape index: {}]
  %s2 = sld [smem:[#allocation0]]
  $region2: #{tpu_custom_call.1} parent=0
    _
  %s4 = ssub.s32 1, %s2
  %s5 = scalar_select 0, %s4, %s2
  %s7 = sshll.u32 1, 14
  %s8 = sxor.u32 4294967295, %s7
  %s10 = sshll.u32 %s0, 4
  %s11 = int_to_ptr.hbm [resolvable:$true] %s10
  %s12 = sshll.u32 %s1, 4
  %s13 = int_to_ptr.hbm [resolvable:$true] %s12
  %16 = dma.general %s11, 512, %s13, [#allocation2], [#allocation3], [#allocation4], 0, 0
  %s17 = smul.u32 8, 2
  %s18 = smul.u32 %s17, 2
  %s19 = sshll.u32 %s18, 4
  %20 = dma.done [#allocation2], %s19
  %21 = vsyncmov [#allocation2]
  %s22 = vpop.sfrf %21
  %p23 = scmp.eq.s32.totalorder %s22, 0
  %p24 = pneg %p23
  %26 = shalt.err (%p24)
  %s27 = scalar_lea.sflag [#allocation2], 1
  %28 = vsyncmov %s27
  %s29 = vpop.sfrf %28
  %p30 = scmp.eq.s32.totalorder %s29, 0
  %p31 = pneg %p30
  %33 = shalt.err (%p31)

</llo_original>
